<compile_context>
chip_gen: v5e
topology: v5e:2x2
jax: 0.10.0
libtpu: 0.0.40
codegen_flags: <defaults>
</compile_context>

<pallas_src>
import jax
import jax.numpy as jnp
from jax import lax
from jax.experimental import pallas as pl
from jax.experimental.pallas import tpu as pltpu


def _twin_q_kernel(obs_ref, act_ref,
                   w1o_ref, w1a_ref, b1_ref,
                   w2_ref, b2_ref,
                   w3_ref, b3_ref,
                   w4_ref, b4_ref,
                   out_ref):
    """Fused twin-Q MLP, transposed layout: features on sublanes, batch on lanes."""
    nt = (((1,), (1,)), ((), ()))   # contract last dims of both operands: A @ B^T

    # Layer 1: implicit concat([obs, act]) @ W1 as two summed NT dots -> h^T.
    h = (lax.dot_general(w1o_ref[...], obs_ref[...], nt,
                         preferred_element_type=jnp.float32)
         + lax.dot_general(w1a_ref[...], act_ref[...], nt,
                           preferred_element_type=jnp.float32)
         + b1_ref[...])
    h = jnp.maximum(h, 0.0)

    # Layers 2-3: block-diagonal fused weights keep the two heads independent.
    h = jnp.dot(w2_ref[...], h, preferred_element_type=jnp.float32) + b2_ref[...]
    h = jnp.maximum(h, 0.0)
    h = jnp.dot(w3_ref[...], h, preferred_element_type=jnp.float32) + b3_ref[...]
    h = jnp.maximum(h, 0.0)

    # Layer 4: (2*out, Hp) @ (Hp, TB) -> lane-dense (2*out, TB) output tile.
    q_t = jnp.dot(w4_ref[...], h, preferred_element_type=jnp.float32) + b4_ref[...]
    out_ref[...] = q_t.astype(out_ref.dtype)


def _round_up(n, m):
    return ((n + m - 1) // m) * m


def _block_diag(a, b):
    ra, ca = a.shape
    rb, cb = b.shape
    top = jnp.concatenate([a, jnp.zeros((ra, cb), a.dtype)], axis=1)
    bot = jnp.concatenate([jnp.zeros((rb, ca), b.dtype), b], axis=1)
    return jnp.concatenate([top, bot], axis=0)


def prepare_critic_params(q1_params, q2_params, observation_dim):
    """Fuse the two Q heads into transposed, padded kernel weights.

    Run ONCE (or after each optimizer / target update), NOT on every forward.
    """
    (w1a, b1a), (w2a, b2a), (w3a, b3a), (w4a, b4a) = q1_params
    (w1b, b1b), (w2b, b2b), (w3b, b3b), (w4b, b4b) = q2_params
    in_dim, hidden = w1a.shape
    out_dim = w4a.shape[1]
    h2 = 2 * hidden
    h2p = _round_up(h2, 8)          # fused hidden width padded to f32 sublane

    def pad_rows(x):
        return jnp.pad(x, ((0, h2p - x.shape[0]),) + ((0, 0),) * (x.ndim - 1))

    def pad_cols(x):
        return jnp.pad(x, ((0, 0), (0, h2p - x.shape[1])))

    # Layer 1: concat heads on the output axis, transpose, split obs/act rows.
    w1_t = pad_rows(jnp.concatenate([w1a, w1b], axis=1).T)          # (h2p, in_dim)
    w1o_t = w1_t[:, :observation_dim]                               # (h2p, obs_dim)
    w1a_t = w1_t[:, observation_dim:]                               # (h2p, act_dim)
    b1_t = pad_rows(jnp.concatenate([b1a, b1b])).reshape(h2p, 1)

    def fuse_mid(wa, wb, ba, bb):
        w_t = pad_cols(pad_rows(_block_diag(wa.T, wb.T)))           # (h2p, h2p)
        b_t = pad_rows(jnp.concatenate([ba, bb])).reshape(h2p, 1)
        return w_t, b_t

    w2_t, b2_t = fuse_mid(w2a, w2b, b2a, b2b)
    w3_t, b3_t = fuse_mid(w3a, w3b, b3a, b3b)
    w4_t = pad_cols(_block_diag(w4a.T, w4b.T))                      # (2*out, h2p)
    b4_t = jnp.concatenate([b4a, b4b]).reshape(2 * out_dim, 1)

    return (w1o_t, w1a_t, b1_t, w2_t, b2_t, w3_t, b3_t, w4_t, b4_t)


@jax.jit
def critic_forward(observation, action, fused_params):
    """Equivalent of Critic.forward: returns (q1, q2), each (B, out_dim) f32."""
    (w1o_t, w1a_t, b1_t, w2_t, b2_t, w3_t, b3_t, w4_t, b4_t) = fused_params
    batch, obs_dim = observation.shape
    act_dim = action.shape[1]
    h2p = w2_t.shape[0]
    two_out = w4_t.shape[0]
    out_dim = two_out // 2

    # Batch tile: rows land on the output lane axis, so TB is a multiple of 128.
    # Pick the largest TB (<= 2048) that divides the 128-padded batch and still
    # leaves >= 2 grid steps when the batch allows it (v7x megacore sharding).
    padded_b = _round_up(batch, 128)
    n_tiles = padded_b // 128
    limit = min(2048 // 128, max(1, n_tiles // 2))
    tiles_per_step = max(d for d in range(1, limit + 1) if n_tiles % d == 0)
    tb = tiles_per_step * 128

    if padded_b != batch:
        pad = padded_b - batch
        observation = jnp.pad(observation, ((0, pad), (0, 0)))
        action = jnp.pad(action, ((0, pad), (0, 0)))
    grid = (padded_b // tb,)

    def resident(shape):
        # Weights/biases: same full block every grid step -> stays in VMEM.
        return pl.BlockSpec(shape, lambda i: (0, 0))

    out_t = pl.pallas_call(
        _twin_q_kernel,
        out_shape=jax.ShapeDtypeStruct((two_out, padded_b), jnp.float32),
        grid=grid,
        in_specs=[
            pl.BlockSpec((tb, obs_dim), lambda i: (i, 0)),
            pl.BlockSpec((tb, act_dim), lambda i: (i, 0)),
            resident((h2p, obs_dim)),
            resident((h2p, act_dim)),
            resident((h2p, 1)),
            resident((h2p, h2p)),
            resident((h2p, 1)),
            resident((h2p, h2p)),
            resident((h2p, 1)),
            resident((two_out, h2p)),
            resident((two_out, 1)),
        ],
        out_specs=pl.BlockSpec((two_out, tb), lambda i: (0, i)),
        compiler_params=pltpu.CompilerParams(
            dimension_semantics=("parallel",)),
    )(observation, action, w1o_t, w1a_t, b1_t, w2_t, b2_t, w3_t, b3_t,
      w4_t, b4_t)

    # Column b of out_t holds [q1(b); q2(b)].  Padded batch columns are dropped.
    q1 = out_t[0:out_dim, :batch].T
    q2 = out_t[out_dim:two_out, :batch].T
    return q1, q2


def _init_linear(key, in_features, out_features):
    """Deterministic init mimicking torch.nn.Linear (uniform +-1/sqrt(fan_in)).

    Weight stored as (in_features, out_features) so forward is x @ W + b.
    """
    kw, kb = jax.random.split(key)
    bound = 1.0 / jnp.sqrt(jnp.float32(in_features))
    w = jax.random.uniform(kw, (in_features, out_features), jnp.float32,
                           minval=-bound, maxval=bound)
    b = jax.random.uniform(kb, (out_features,), jnp.float32,
                           minval=-bound, maxval=bound)
    return w, b


def init_critic_params(key, observation_dim, action_dim,
                       hidden_size=32, output_size=1):
    in_dim = observation_dim + action_dim
    dims = [(in_dim, hidden_size), (hidden_size, hidden_size),
            (hidden_size, hidden_size), (hidden_size, output_size)]
    keys = jax.random.split(key, 2 * len(dims))
    q1 = [_init_linear(keys[i], di, do) for i, (di, do) in enumerate(dims)]
    q2 = [_init_linear(keys[len(dims) + i], di, do)
          for i, (di, do) in enumerate(dims)]
    return q1, q2


if __name__ == "__main__":
    # Small shapes: batch=300 (exercises padding + a multi-step grid),
    # observation_dim=16, action_dim=8, hidden=32, out=1.
    batch, obs_dim, act_dim, hidden, out_dim = 300, 16, 8, 32, 1

    key = jax.random.PRNGKey(0)
    k_obs, k_act, k_params = jax.random.split(key, 3)

    observation = jax.random.normal(k_obs, (batch, obs_dim), jnp.float32)
    action = jax.random.normal(k_act, (batch, act_dim), jnp.float32)

    q1_params, q2_params = init_critic_params(
        k_params, obs_dim, act_dim, hidden_size=hidden, output_size=out_dim)

    # Head fusion hoisted out of the forward path (done once per param update).
    fused = prepare_critic_params(q1_params, q2_params, obs_dim)

    q1, q2 = critic_forward(observation, action, fused)
    jax.block_until_ready((q1, q2))

    # Sanity check against a pure-JAX reference of the same math.
    def ref_head(x, params):
        h = x
        for i, (w, b) in enumerate(params):
            h = h @ w + b
            if i < len(params) - 1:
                h = jnp.maximum(h, 0.0)
        return h

    x_ref = jnp.concatenate((observation, action), axis=1)
    r1 = ref_head(x_ref, q1_params)
    r2 = ref_head(x_ref, q2_params)
    assert q1.shape == (batch, out_dim) and q2.shape == (batch, out_dim)
    assert jnp.allclose(q1, r1, atol=1e-5) and jnp.allclose(q2, r2, atol=1e-5)

    print("KERNEL_OK")
</pallas_src>

<mosaic_0001>
module attributes {stable_mosaic.version = 11 : i64} {
  func.func @_twin_q_kernel(%arg0: i32, %arg1: memref<128x16xf32, #tpu.memory_space<vmem>>, %arg2: memref<128x8xf32, #tpu.memory_space<vmem>>, %arg3: memref<64x16xf32, #tpu.memory_space<vmem>>, %arg4: memref<64x8xf32, #tpu.memory_space<vmem>>, %arg5: memref<64x1xf32, #tpu.memory_space<vmem>>, %arg6: memref<64x64xf32, #tpu.memory_space<vmem>>, %arg7: memref<64x1xf32, #tpu.memory_space<vmem>>, %arg8: memref<64x64xf32, #tpu.memory_space<vmem>>, %arg9: memref<64x1xf32, #tpu.memory_space<vmem>>, %arg10: memref<2x64xf32, #tpu.memory_space<vmem>>, %arg11: memref<2x1xf32, #tpu.memory_space<vmem>>, %arg12: memref<2x128xf32, #tpu.memory_space<vmem>>) attributes {dimension_semantics = [#tpu.dimension_semantics<parallel>], iteration_bounds = array<i64: 3>, scalar_prefetch = 0 : i64, scratch_operands = 0 : i64, tpu.core_type = #tpu.core_type<tc>, window_params = [{transform_indices = @transform_0, window_bounds = array<i64: 128, 16>}, {transform_indices = @transform_1, window_bounds = array<i64: 128, 8>}, {pipeline_mode = #tpu.pipeline_mode<synchronous>, transform_indices = @transform_2, window_bounds = array<i64: 64, 16>}, {pipeline_mode = #tpu.pipeline_mode<synchronous>, transform_indices = @transform_3, window_bounds = array<i64: 64, 8>}, {pipeline_mode = #tpu.pipeline_mode<synchronous>, transform_indices = @transform_4, window_bounds = array<i64: 64, 1>}, {pipeline_mode = #tpu.pipeline_mode<synchronous>, transform_indices = @transform_5, window_bounds = array<i64: 64, 64>}, {pipeline_mode = #tpu.pipeline_mode<synchronous>, transform_indices = @transform_6, window_bounds = array<i64: 64, 1>}, {pipeline_mode = #tpu.pipeline_mode<synchronous>, transform_indices = @transform_7, window_bounds = array<i64: 64, 64>}, {pipeline_mode = #tpu.pipeline_mode<synchronous>, transform_indices = @transform_8, window_bounds = array<i64: 64, 1>}, {pipeline_mode = #tpu.pipeline_mode<synchronous>, transform_indices = @transform_9, window_bounds = array<i64: 2, 64>}, {pipeline_mode = #tpu.pipeline_mode<synchronous>, transform_indices = @transform_10, window_bounds = array<i64: 2, 1>}, {transform_indices = @transform_11, window_bounds = array<i64: 2, 128>}]} {
    %c0 = arith.constant 0 : index
    %c0_0 = arith.constant 0 : index
    %0 = vector.load %arg3[%c0, %c0_0] : memref<64x16xf32, #tpu.memory_space<vmem>>, vector<64x16xf32>
    %c0_1 = arith.constant 0 : index
    %c0_2 = arith.constant 0 : index
    %1 = vector.load %arg1[%c0_1, %c0_2] : memref<128x16xf32, #tpu.memory_space<vmem>>, vector<128x16xf32>
    %cst = arith.constant dense<0.000000e+00> : vector<64x128xf32>
    %2 = tpu.matmul %0, %1, %cst {dimension_numbers = #tpu.dot_dimension_numbers<[1], [1], [0], [0], [0, 0, 1, 0], [], []>} : vector<64x16xf32>, vector<128x16xf32>, vector<64x128xf32> -> vector<64x128xf32>
    %c0_3 = arith.constant 0 : index
    %c0_4 = arith.constant 0 : index
    %3 = vector.load %arg4[%c0_3, %c0_4] : memref<64x8xf32, #tpu.memory_space<vmem>>, vector<64x8xf32>
    %c0_5 = arith.constant 0 : index
    %c0_6 = arith.constant 0 : index
    %4 = vector.load %arg2[%c0_5, %c0_6] : memref<128x8xf32, #tpu.memory_space<vmem>>, vector<128x8xf32>
    %cst_7 = arith.constant dense<0.000000e+00> : vector<64x128xf32>
    %5 = tpu.matmul %3, %4, %cst_7 {dimension_numbers = #tpu.dot_dimension_numbers<[1], [1], [0], [0], [0, 0, 1, 0], [], []>} : vector<64x8xf32>, vector<128x8xf32>, vector<64x128xf32> -> vector<64x128xf32>
    %6 = arith.addf %2, %5 : vector<64x128xf32>
    %c0_8 = arith.constant 0 : index
    %c0_9 = arith.constant 0 : index
    %7 = vector.load %arg5[%c0_8, %c0_9] : memref<64x1xf32, #tpu.memory_space<vmem>>, vector<64x1xf32>
    %8 = vector.broadcast %7 : vector<64x1xf32> to vector<64x128xf32>
    %9 = arith.addf %6, %8 : vector<64x128xf32>
    %cst_10 = arith.constant 0.000000e+00 : f32
    %10 = vector.broadcast %cst_10 : f32 to vector<64x128xf32>
    %11 = arith.maximumf %9, %10 : vector<64x128xf32>
    %c0_11 = arith.constant 0 : index
    %c0_12 = arith.constant 0 : index
    %12 = vector.load %arg6[%c0_11, %c0_12] : memref<64x64xf32, #tpu.memory_space<vmem>>, vector<64x64xf32>
    %cst_13 = arith.constant dense<0.000000e+00> : vector<64x128xf32>
    %13 = tpu.matmul %12, %11, %cst_13 {dimension_numbers = #tpu.dot_dimension_numbers<[1], [0], [0], [1], [0, 0, 1, 1], [], []>} : vector<64x64xf32>, vector<64x128xf32>, vector<64x128xf32> -> vector<64x128xf32>
    %c0_14 = arith.constant 0 : index
    %c0_15 = arith.constant 0 : index
    %14 = vector.load %arg7[%c0_14, %c0_15] : memref<64x1xf32, #tpu.memory_space<vmem>>, vector<64x1xf32>
    %15 = vector.broadcast %14 : vector<64x1xf32> to vector<64x128xf32>
    %16 = arith.addf %13, %15 : vector<64x128xf32>
    %cst_16 = arith.constant 0.000000e+00 : f32
    %17 = vector.broadcast %cst_16 : f32 to vector<64x128xf32>
    %18 = arith.maximumf %16, %17 : vector<64x128xf32>
    %c0_17 = arith.constant 0 : index
    %c0_18 = arith.constant 0 : index
    %19 = vector.load %arg8[%c0_17, %c0_18] : memref<64x64xf32, #tpu.memory_space<vmem>>, vector<64x64xf32>
    %cst_19 = arith.constant dense<0.000000e+00> : vector<64x128xf32>
    %20 = tpu.matmul %19, %18, %cst_19 {dimension_numbers = #tpu.dot_dimension_numbers<[1], [0], [0], [1], [0, 0, 1, 1], [], []>} : vector<64x64xf32>, vector<64x128xf32>, vector<64x128xf32> -> vector<64x128xf32>
    %c0_20 = arith.constant 0 : index
    %c0_21 = arith.constant 0 : index
    %21 = vector.load %arg9[%c0_20, %c0_21] : memref<64x1xf32, #tpu.memory_space<vmem>>, vector<64x1xf32>
    %22 = vector.broadcast %21 : vector<64x1xf32> to vector<64x128xf32>
    %23 = arith.addf %20, %22 : vector<64x128xf32>
    %cst_22 = arith.constant 0.000000e+00 : f32
    %24 = vector.broadcast %cst_22 : f32 to vector<64x128xf32>
    %25 = arith.maximumf %23, %24 : vector<64x128xf32>
    %c0_23 = arith.constant 0 : index
    %c0_24 = arith.constant 0 : index
    %26 = vector.load %arg10[%c0_23, %c0_24] : memref<2x64xf32, #tpu.memory_space<vmem>>, vector<2x64xf32>
    %cst_25 = arith.constant dense<0.000000e+00> : vector<2x128xf32>
    %27 = tpu.matmul %26, %25, %cst_25 {dimension_numbers = #tpu.dot_dimension_numbers<[1], [0], [0], [1], [0, 0, 1, 1], [], []>} : vector<2x64xf32>, vector<64x128xf32>, vector<2x128xf32> -> vector<2x128xf32>
    %c0_26 = arith.constant 0 : index
    %c0_27 = arith.constant 0 : index
    %28 = vector.load %arg11[%c0_26, %c0_27] : memref<2x1xf32, #tpu.memory_space<vmem>>, vector<2x1xf32>
    %29 = vector.broadcast %28 : vector<2x1xf32> to vector<2x128xf32>
    %30 = arith.addf %27, %29 : vector<2x128xf32>
    %c0_28 = arith.constant 0 : index
    %c0_29 = arith.constant 0 : index
    %31 = vector.load %arg12[%c0_28, %c0_29] : memref<2x128xf32, #tpu.memory_space<vmem>>, vector<2x128xf32>
    tpu.vector_store %arg12[%c0_28, %c0_29], %30 {strides = array<i32>} : memref<2x128xf32, #tpu.memory_space<vmem>>, vector<2x128xf32>,
    return
  }
  func.func @transform_0(%arg0: i32) -> (i32, i32) {
    %c0_i32 = arith.constant 0 : i32
    %c0_i32_0 = arith.constant 0 : i32
    return %arg0, %c0_i32 : i32, i32
  }
  func.func @transform_1(%arg0: i32) -> (i32, i32) {
    %c0_i32 = arith.constant 0 : i32
    %c0_i32_0 = arith.constant 0 : i32
    return %arg0, %c0_i32 : i32, i32
  }
  func.func @transform_2(%arg0: i32) -> (i32, i32) {
    %c0_i32 = arith.constant 0 : i32
    %c0_i32_0 = arith.constant 0 : i32
    %c0_i32_1 = arith.constant 0 : i32
    return %c0_i32, %c0_i32_0 : i32, i32
  }
  func.func @transform_3(%arg0: i32) -> (i32, i32) {
    %c0_i32 = arith.constant 0 : i32
    %c0_i32_0 = arith.constant 0 : i32
    %c0_i32_1 = arith.constant 0 : i32
    return %c0_i32, %c0_i32_0 : i32, i32
  }
  func.func @transform_4(%arg0: i32) -> (i32, i32) {
    %c0_i32 = arith.constant 0 : i32
    %c0_i32_0 = arith.constant 0 : i32
    %c0_i32_1 = arith.constant 0 : i32
    return %c0_i32, %c0_i32_0 : i32, i32
  }
  func.func @transform_5(%arg0: i32) -> (i32, i32) {
    %c0_i32 = arith.constant 0 : i32
    %c0_i32_0 = arith.constant 0 : i32
    %c0_i32_1 = arith.constant 0 : i32
    return %c0_i32, %c0_i32_0 : i32, i32
  }
  func.func @transform_6(%arg0: i32) -> (i32, i32) {
    %c0_i32 = arith.constant 0 : i32
    %c0_i32_0 = arith.constant 0 : i32
    %c0_i32_1 = arith.constant 0 : i32
    return %c0_i32, %c0_i32_0 : i32, i32
  }
  func.func @transform_7(%arg0: i32) -> (i32, i32) {
    %c0_i32 = arith.constant 0 : i32
    %c0_i32_0 = arith.constant 0 : i32
    %c0_i32_1 = arith.constant 0 : i32
    return %c0_i32, %c0_i32_0 : i32, i32
  }
  func.func @transform_8(%arg0: i32) -> (i32, i32) {
    %c0_i32 = arith.constant 0 : i32
    %c0_i32_0 = arith.constant 0 : i32
    %c0_i32_1 = arith.constant 0 : i32
    return %c0_i32, %c0_i32_0 : i32, i32
  }
  func.func @transform_9(%arg0: i32) -> (i32, i32) {
    %c0_i32 = arith.constant 0 : i32
    %c0_i32_0 = arith.constant 0 : i32
    %c0_i32_1 = arith.constant 0 : i32
    return %c0_i32, %c0_i32_0 : i32, i32
  }
  func.func @transform_10(%arg0: i32) -> (i32, i32) {
    %c0_i32 = arith.constant 0 : i32
    %c0_i32_0 = arith.constant 0 : i32
    %c0_i32_1 = arith.constant 0 : i32
    return %c0_i32, %c0_i32_0 : i32, i32
  }
  func.func @transform_11(%arg0: i32) -> (i32, i32) {
    %c0_i32 = arith.constant 0 : i32
    %c0_i32_0 = arith.constant 0 : i32
    return %c0_i32, %arg0 : i32, i32
  }
}

</mosaic_0001>

<llo_original>
// kernel: critic_forward.1
$region0: #{critic_forward.1}
  #allocation0 [shape = 'u32[]', space=smem, size = 0x4, offset = 0x4, fixed_abs, tag = 'smem constant byte address 0x4 - core index']
  #allocation1 [shape = 'u32[72,128]{1,0:T(1,128)}', space=vmem, size = 0x9000, scoped, tag = 'internal scratch']
  %s0 = inlined_call_operand.vmem [shape: f32[384,16], index: 0, kind: input, shape index: {}]
  %s1 = inlined_call_operand.vmem [shape: f32[384,8], index: 1, kind: input, shape index: {}]
  %s2 = inlined_call_operand.vmem [shape: f32[64,16], index: 2, kind: input, shape index: {}]
  %s3 = inlined_call_operand.vmem [shape: f32[64,8], index: 3, kind: input, shape index: {}]
  %s4 = inlined_call_operand.vmem [shape: f32[64,1], index: 4, kind: input, shape index: {}]
  %s5 = inlined_call_operand.vmem [shape: f32[64,64], index: 5, kind: input, shape index: {}]
  %s6 = inlined_call_operand.vmem [shape: f32[64,1], index: 6, kind: input, shape index: {}]
  %s7 = inlined_call_operand.vmem [shape: f32[64,64], index: 7, kind: input, shape index: {}]
  %s8 = inlined_call_operand.vmem [shape: f32[64,1], index: 8, kind: input, shape index: {}]
  %s9 = inlined_call_operand.vmem [shape: f32[2,64], index: 9, kind: input, shape index: {}]
  %s10 = inlined_call_operand.vmem [shape: f32[2,1], index: 10, kind: input, shape index: {}]
  %s11 = inlined_call_operand.vmem [shape: f32[2,384], index: 11, kind: output, shape index: {}]
  %s12 = sld [smem:[#allocation0]]
  $region77: #{critic_forward.1} parent=0
    _
  %s14 = ssub.s32 1, %s12
  %s15 = scalar_select 0, %s14, %s12
  loop: start=0, step=1, limit=5
  $region2: #{critic_forward.1} parent=0 // loop_pre_header
    _
  $region3: #{critic_forward.1} parent=0 // loop_header
    %s17 = sphi 0, %s21
    %p18 = scmp.ge.s32.totalorder %s17, 5
    %s27 = sphi 0, %s29
    %s30 = sphi 0, %s27
    %s31 = sphi 0, %s30
    %s47 = sphi 0, %s31
    %s53 = sphi 0, %s55
    %s56 = sphi 0, %s53
    %s57 = sphi 0, %s56
    %s73 = sphi 0, %s57
    %s77 = sphi 0, %s77
    %s79 = sphi 0, %s77
    %s80 = sphi 0, %s79
    %s94 = sphi 0, %s80
    %s98 = sphi 0, %s98
    %s100 = sphi 0, %s98
    %s101 = sphi 0, %s100
    %s115 = sphi 0, %s101
    %s119 = sphi 0, %s119
    %s121 = sphi 0, %s119
    %s122 = sphi 0, %s121
    %s136 = sphi 0, %s122
    %s140 = sphi 0, %s140
    %s142 = sphi 0, %s140
    %s143 = sphi 0, %s142
    %s157 = sphi 0, %s143
    %s161 = sphi 0, %s161
    %s163 = sphi 0, %s161
    %s164 = sphi 0, %s163
    %s178 = sphi 0, %s164
    %s182 = sphi 0, %s182
    %s184 = sphi 0, %s182
    %s185 = sphi 0, %s184
    %s199 = sphi 0, %s185
    %s203 = sphi 0, %s203
    %s205 = sphi 0, %s203
    %s206 = sphi 0, %s205
    %s220 = sphi 0, %s206
    %s224 = sphi 0, %s224
    %s226 = sphi 0, %s224
    %s227 = sphi 0, %s226
    %s241 = sphi 0, %s227
    %s245 = sphi 0, %s245
    %s247 = sphi 0, %s245
    %s248 = sphi 0, %s247
    %s262 = sphi 0, %s248
    %s268 = sphi 0, %s270
    %s271 = sphi 0, %s268
    %s272 = sphi 0, %s271
    %s288 = sphi 0, %s272
  $region4: #{critic_forward.1} parent=0 // loop_header_branch
    %20 = sbr.rel (%p18) target = $region8
  $region5: #{critic_forward.1} parent=0 // loop_body
    %s22 = ssub.s32 %s17, 1
    %s23 = ssub.s32 %s17, 2
    %s24 = sadd.s32 %s17, 1
    %s25 = ssub.s32 %s17, %s24
    %p26 = scmp.eq.s32.totalorder %s25, 0
    %s28 = sadd.s32 %s27, 1
    %s29 = scalar_select %p26, %s27, %s28
    %p32 = pneg %p26
    %p33 = scmp.eq.s32.totalorder %s17, 2
    %p34 = por %p32, %p33
    %p35 = scmp.ne.s32.totalorder %s27, %s30
    %p36 = scmp.eq.s32.totalorder %s17, 0
    %p37 = por %p35, %p36
    %p38 = scmp.ne.s32.totalorder %s27, %s30
    %p39 = scmp.eq.s32.totalorder %s22, 2
    %p40 = por %p38, %p39
    %p41 = scmp.ne.s32.totalorder %s30, %s31
    %p42 = scmp.eq.s32.totalorder %s22, 0
    %p43 = por %p41, %p42
    %p44 = scmp.ne.s32.totalorder %s30, %s31
    %p45 = scmp.eq.s32.totalorder %s23, 2
    %p46 = por %p44, %p45
    %p48 = scmp.ne.s32.totalorder %s31, %s47
    %p49 = scmp.eq.s32.totalorder %s23, 0
    %p50 = por %p48, %p49
    %s51 = ssub.s32 %s17, %s24
    %p52 = scmp.eq.s32.totalorder %s51, 0
    %s54 = sadd.s32 %s53, 1
    %s55 = scalar_select %p52, %s53, %s54
    %p58 = pneg %p52
    %p59 = scmp.eq.s32.totalorder %s17, 2
    %p60 = por %p58, %p59
    %p61 = scmp.ne.s32.totalorder %s53, %s56
    %p62 = scmp.eq.s32.totalorder %s17, 0
    %p63 = por %p61, %p62
    %p64 = scmp.ne.s32.totalorder %s53, %s56
    %p65 = scmp.eq.s32.totalorder %s22, 2
    %p66 = por %p64, %p65
    %p67 = scmp.ne.s32.totalorder %s56, %s57
    %p68 = scmp.eq.s32.totalorder %s22, 0
    %p69 = por %p67, %p68
    %p70 = scmp.ne.s32.totalorder %s56, %s57
    %p71 = scmp.eq.s32.totalorder %s23, 2
    %p72 = por %p70, %p71
    %p74 = scmp.ne.s32.totalorder %s57, %s73
    %p75 = scmp.eq.s32.totalorder %s23, 0
    %p76 = por %p74, %p75
    %s78 = sadd.s32 %s77, 1
    %p81 = scmp.eq.s32.totalorder %s17, 2
    %p82 = scmp.ne.s32.totalorder %s77, %s79
    %p83 = scmp.eq.s32.totalorder %s17, 0
    %p84 = por %p82, %p83
    %p85 = scmp.ne.s32.totalorder %s77, %s79
    %p86 = scmp.eq.s32.totalorder %s22, 2
    %p87 = por %p85, %p86
    %p88 = scmp.ne.s32.totalorder %s79, %s80
    %p89 = scmp.eq.s32.totalorder %s22, 0
    %p90 = por %p88, %p89
    %p91 = scmp.ne.s32.totalorder %s79, %s80
    %p92 = scmp.eq.s32.totalorder %s23, 2
    %p93 = por %p91, %p92
    %p95 = scmp.ne.s32.totalorder %s80, %s94
    %p96 = scmp.eq.s32.totalorder %s23, 0
    %p97 = por %p95, %p96
    %s99 = sadd.s32 %s98, 1
    %p102 = scmp.eq.s32.totalorder %s17, 2
    %p103 = scmp.ne.s32.totalorder %s98, %s100
    %p104 = scmp.eq.s32.totalorder %s17, 0
    %p105 = por %p103, %p104
    %p106 = scmp.ne.s32.totalorder %s98, %s100
    %p107 = scmp.eq.s32.totalorder %s22, 2
    %p108 = por %p106, %p107
    %p109 = scmp.ne.s32.totalorder %s100, %s101
    %p110 = scmp.eq.s32.totalorder %s22, 0
    %p111 = por %p109, %p110
    %p112 = scmp.ne.s32.totalorder %s100, %s101
    %p113 = scmp.eq.s32.totalorder %s23, 2
    %p114 = por %p112, %p113
    %p116 = scmp.ne.s32.totalorder %s101, %s115
    %p117 = scmp.eq.s32.totalorder %s23, 0
    %p118 = por %p116, %p117
    %s120 = sadd.s32 %s119, 1
    %p123 = scmp.eq.s32.totalorder %s17, 2
    %p124 = scmp.ne.s32.totalorder %s119, %s121
    %p125 = scmp.eq.s32.totalorder %s17, 0
    %p126 = por %p124, %p125
    %p127 = scmp.ne.s32.totalorder %s119, %s121
    %p128 = scmp.eq.s32.totalorder %s22, 2
    %p129 = por %p127, %p128
    %p130 = scmp.ne.s32.totalorder %s121, %s122
    %p131 = scmp.eq.s32.totalorder %s22, 0
    %p132 = por %p130, %p131
    %p133 = scmp.ne.s32.totalorder %s121, %s122
    %p134 = scmp.eq.s32.totalorder %s23, 2
    %p135 = por %p133, %p134
    %p137 = scmp.ne.s32.totalorder %s122, %s136
    %p138 = scmp.eq.s32.totalorder %s23, 0
    %p139 = por %p137, %p138
    %s141 = sadd.s32 %s140, 1
    %p144 = scmp.eq.s32.totalorder %s17, 2
    %p145 = scmp.ne.s32.totalorder %s140, %s142
    %p146 = scmp.eq.s32.totalorder %s17, 0
    %p147 = por %p145, %p146
    %p148 = scmp.ne.s32.totalorder %s140, %s142
    %p149 = scmp.eq.s32.totalorder %s22, 2
    %p150 = por %p148, %p149
    %p151 = scmp.ne.s32.totalorder %s142, %s143
    %p152 = scmp.eq.s32.totalorder %s22, 0
    %p153 = por %p151, %p152
    %p154 = scmp.ne.s32.totalorder %s142, %s143
    %p155 = scmp.eq.s32.totalorder %s23, 2
    %p156 = por %p154, %p155
    %p158 = scmp.ne.s32.totalorder %s143, %s157
    %p159 = scmp.eq.s32.totalorder %s23, 0
    %p160 = por %p158, %p159
    %s162 = sadd.s32 %s161, 1
    %p165 = scmp.eq.s32.totalorder %s17, 2
    %p166 = scmp.ne.s32.totalorder %s161, %s163
    %p167 = scmp.eq.s32.totalorder %s17, 0
    %p168 = por %p166, %p167
    %p169 = scmp.ne.s32.totalorder %s161, %s163
    %p170 = scmp.eq.s32.totalorder %s22, 2
    %p171 = por %p169, %p170
    %p172 = scmp.ne.s32.totalorder %s163, %s164
    %p173 = scmp.eq.s32.totalorder %s22, 0
    %p174 = por %p172, %p173
    %p175 = scmp.ne.s32.totalorder %s163, %s164
    %p176 = scmp.eq.s32.totalorder %s23, 2
    %p177 = por %p175, %p176
    %p179 = scmp.ne.s32.totalorder %s164, %s178
    %p180 = scmp.eq.s32.totalorder %s23, 0
    %p181 = por %p179, %p180
    %s183 = sadd.s32 %s182, 1
    %p186 = scmp.eq.s32.totalorder %s17, 2
    %p187 = scmp.ne.s32.totalorder %s182, %s184
    %p188 = scmp.eq.s32.totalorder %s17, 0
    %p189 = por %p187, %p188
    %p190 = scmp.ne.s32.totalorder %s182, %s184
    %p191 = scmp.eq.s32.totalorder %s22, 2
    %p192 = por %p190, %p191
    %p193 = scmp.ne.s32.totalorder %s184, %s185
    %p194 = scmp.eq.s32.totalorder %s22, 0
    %p195 = por %p193, %p194
    %p196 = scmp.ne.s32.totalorder %s184, %s185
    %p197 = scmp.eq.s32.totalorder %s23, 2
    %p198 = por %p196, %p197
    %p200 = scmp.ne.s32.totalorder %s185, %s199
    %p201 = scmp.eq.s32.totalorder %s23, 0
    %p202 = por %p200, %p201
    %s204 = sadd.s32 %s203, 1
    %p207 = scmp.eq.s32.totalorder %s17, 2
    %p208 = scmp.ne.s32.totalorder %s203, %s205
    %p209 = scmp.eq.s32.totalorder %s17, 0
    %p210 = por %p208, %p209
    %p211 = scmp.ne.s32.totalorder %s203, %s205
    %p212 = scmp.eq.s32.totalorder %s22, 2
    %p213 = por %p211, %p212
    %p214 = scmp.ne.s32.totalorder %s205, %s206
    %p215 = scmp.eq.s32.totalorder %s22, 0
    %p216 = por %p214, %p215
    %p217 = scmp.ne.s32.totalorder %s205, %s206
    %p218 = scmp.eq.s32.totalorder %s23, 2
    %p219 = por %p217, %p218
    %p221 = scmp.ne.s32.totalorder %s206, %s220
    %p222 = scmp.eq.s32.totalorder %s23, 0
    %p223 = por %p221, %p222
    %s225 = sadd.s32 %s224, 1
    %p228 = scmp.eq.s32.totalorder %s17, 2
    %p229 = scmp.ne.s32.totalorder %s224, %s226
    %p230 = scmp.eq.s32.totalorder %s17, 0
    %p231 = por %p229, %p230
    %p232 = scmp.ne.s32.totalorder %s224, %s226
    %p233 = scmp.eq.s32.totalorder %s22, 2
    %p234 = por %p232, %p233
    %p235 = scmp.ne.s32.totalorder %s226, %s227
    %p236 = scmp.eq.s32.totalorder %s22, 0
    %p237 = por %p235, %p236
    %p238 = scmp.ne.s32.totalorder %s226, %s227
    %p239 = scmp.eq.s32.totalorder %s23, 2
    %p240 = por %p238, %p239
    %p242 = scmp.ne.s32.totalorder %s227, %s241
    %p243 = scmp.eq.s32.totalorder %s23, 0
    %p244 = por %p242, %p243
    %s246 = sadd.s32 %s245, 1
    %p249 = scmp.eq.s32.totalorder %s17, 2
    %p250 = scmp.ne.s32.totalorder %s245, %s247
    %p251 = scmp.eq.s32.totalorder %s17, 0
    %p252 = por %p250, %p251
    %p253 = scmp.ne.s32.totalorder %s245, %s247
    %p254 = scmp.eq.s32.totalorder %s22, 2
    %p255 = por %p253, %p254
    %p256 = scmp.ne.s32.totalorder %s247, %s248
    %p257 = scmp.eq.s32.totalorder %s22, 0
    %p258 = por %p256, %p257
    %p259 = scmp.ne.s32.totalorder %s247, %s248
    %p260 = scmp.eq.s32.totalorder %s23, 2
    %p261 = por %p259, %p260
    %p263 = scmp.ne.s32.totalorder %s248, %s262
    %p264 = scmp.eq.s32.totalorder %s23, 0
    %p265 = por %p263, %p264
    %s266 = ssub.s32 %s17, %s24
    %p267 = scmp.eq.s32.totalorder %s266, 0
    %s269 = sadd.s32 %s268, 1
    %s270 = scalar_select %p267, %s268, %s269
    %p273 = pneg %p267
    %p274 = scmp.eq.s32.totalorder %s17, 2
    %p275 = por %p273, %p274
    %p276 = scmp.ne.s32.totalorder %s268, %s271
    %p277 = scmp.eq.s32.totalorder %s17, 0
    %p278 = por %p276, %p277
    %p279 = scmp.ne.s32.totalorder %s268, %s271
    %p280 = scmp.eq.s32.totalorder %s22, 2
    %p281 = por %p279, %p280
    %p282 = scmp.ne.s32.totalorder %s271, %s272
    %p283 = scmp.eq.s32.totalorder %s22, 0
    %p284 = por %p282, %p283
    %p285 = scmp.ne.s32.totalorder %s271, %s272
    %p286 = scmp.eq.s32.totalorder %s23, 2
    %p287 = por %p285, %p286
    %p289 = scmp.ne.s32.totalorder %s272, %s288
    %p290 = scmp.eq.s32.totalorder %s23, 0
    %p291 = por %p289, %p290
    %p292 = scmp.le.s32.totalorder 1, %s17
    %p293 = scmp.lt.s32.totalorder %s17, 4
    %p294 = pnand %p292, %p293
    %p295 = pneg %p294
    // Predicated region
    $region9: #{critic_forward.1} parent=5 // pred_check
      _
    $region10: #{critic_forward.1} parent=5 // pred_check_branch
      %297 = sbr.rel (%p294) target = $region12
    $region11: #{critic_forward.1} parent=5 // pred_region
      %s298 = ssub.s32 %s17, 1
      // Predicated region
      $region13: #{critic_forward.1} parent=11 // pred_check
        %p299 = pneg %p90
      $region14: #{critic_forward.1} parent=11 // pred_check_branch
        %301 = sbr.rel (%p299) target = $region16
      $region15: #{critic_forward.1} parent=11 // pred_region
        _
      $region16: #{critic_forward.1} parent=11 // pred_fallthru
        _
      // Predicated region
      $region17: #{critic_forward.1} parent=11 // pred_check
        %p302 = pneg %p111
      $region18: #{critic_forward.1} parent=11 // pred_check_branch
        %304 = sbr.rel (%p302) target = $region20
      $region19: #{critic_forward.1} parent=11 // pred_region
        _
      $region20: #{critic_forward.1} parent=11 // pred_fallthru
        _
      // Predicated region
      $region21: #{critic_forward.1} parent=11 // pred_check
        %p305 = pneg %p132
      $region22: #{critic_forward.1} parent=11 // pred_check_branch
        %307 = sbr.rel (%p305) target = $region24
      $region23: #{critic_forward.1} parent=11 // pred_region
        _
      $region24: #{critic_forward.1} parent=11 // pred_fallthru
        _
      // Predicated region
      $region25: #{critic_forward.1} parent=11 // pred_check
        %p308 = pneg %p153
      $region26: #{critic_forward.1} parent=11 // pred_check_branch
        %310 = sbr.rel (%p308) target = $region28
      $region27: #{critic_forward.1} parent=11 // pred_region
        _
      $region28: #{critic_forward.1} parent=11 // pred_fallthru
        _
      // Predicated region
      $region29: #{critic_forward.1} parent=11 // pred_check
        %p311 = pneg %p174
      $region30: #{critic_forward.1} parent=11 // pred_check_branch
        %313 = sbr.rel (%p311) target = $region32
      $region31: #{critic_forward.1} parent=11 // pred_region
        _
      $region32: #{critic_forward.1} parent=11 // pred_fallthru
        _
      // Predicated region
      $region33: #{critic_forward.1} parent=11 // pred_check
        %p314 = pneg %p195
      $region34: #{critic_forward.1} parent=11 // pred_check_branch
        %316 = sbr.rel (%p314) target = $region36
      $region35: #{critic_forward.1} parent=11 // pred_region
        _
      $region36: #{critic_forward.1} parent=11 // pred_fallthru
        _
      // Predicated region
      $region37: #{critic_forward.1} parent=11 // pred_check
        %p317 = pneg %p216
      $region38: #{critic_forward.1} parent=11 // pred_check_branch
        %319 = sbr.rel (%p317) target = $region40
      $region39: #{critic_forward.1} parent=11 // pred_region
        _
      $region40: #{critic_forward.1} parent=11 // pred_fallthru
        _
      // Predicated region
      $region41: #{critic_forward.1} parent=11 // pred_check
        %p320 = pneg %p237
      $region42: #{critic_forward.1} parent=11 // pred_check_branch
        %322 = sbr.rel (%p320) target = $region44
      $region43: #{critic_forward.1} parent=11 // pred_region
        _
      $region44: #{critic_forward.1} parent=11 // pred_fallthru
        _
      // Predicated region
      $region45: #{critic_forward.1} parent=11 // pred_check
        %p323 = pneg %p258
      $region46: #{critic_forward.1} parent=11 // pred_check_branch
        %325 = sbr.rel (%p323) target = $region48
      $region47: #{critic_forward.1} parent=11 // pred_region
        _
      $region48: #{critic_forward.1} parent=11 // pred_fallthru
        _
    $region12: #{critic_forward.1} parent=5 // pred_fallthru
      _
    %p326 = scmp.lt.s32.totalorder %s17, 3
    // Predicated region
    $region49: #{critic_forward.1} parent=5 // pred_check
      %p327 = pneg %p326
    $region50: #{critic_forward.1} parent=5 // pred_check_branch
      %329 = sbr.rel (%p327) target = $region52
    $region51: #{critic_forward.1} parent=5 // pred_region
      // Predicated region
      $region53: #{critic_forward.1} parent=51 // pred_check
        %p330 = pneg %p37
      $region54: #{critic_forward.1} parent=51 // pred_check_branch
        %332 = sbr.rel (%p330) target = $region56
      $region55: #{critic_forward.1} parent=51 // pred_region
        %s333 = smul.u32 16, %s17
        %p334 = scmp.lt.s32.totalorder %s333, 47
        %s335 = scalar_select %p334, %s333, 47
        %s336 = smul.addr %s335, 8
        %s337 = scalar_lea.vmem %s0, %s336
        %s338 = smul.u32 16, %s17
      $region56: #{critic_forward.1} parent=51 // pred_fallthru
        _
      // Predicated region
      $region57: #{critic_forward.1} parent=51 // pred_check
        %p339 = pneg %p63
      $region58: #{critic_forward.1} parent=51 // pred_check_branch
        %341 = sbr.rel (%p339) target = $region60
      $region59: #{critic_forward.1} parent=51 // pred_region
        %s342 = smul.u32 16, %s17
        %p343 = scmp.lt.s32.totalorder %s342, 47
        %s344 = scalar_select %p343, %s342, 47
        %s345 = smul.addr %s344, 8
        %s346 = scalar_lea.vmem %s1, %s345
        %s347 = smul.u32 16, %s17
      $region60: #{critic_forward.1} parent=51 // pred_fallthru
        _
    $region52: #{critic_forward.1} parent=5 // pred_fallthru
      _
    %p348 = scmp.le.s32.totalorder 1, %s17
    %p349 = scmp.lt.s32.totalorder %s17, 4
    %p350 = pnand %p348, %p349
    %p351 = pneg %p350
    // Predicated region
    $region61: #{critic_forward.1} parent=5 // pred_check
      _
    $region62: #{critic_forward.1} parent=5 // pred_check_branch
      %353 = sbr.rel (%p350) target = $region64
    $region63: #{critic_forward.1} parent=5 // pred_region
      %s354 = ssub.s32 %s17, 1
      %s355 = smul.u32 16, %s22
      %p356 = scmp.lt.s32.totalorder %s355, 47
      %s357 = scalar_select %p356, %s355, 47
      %s358 = smul.addr %s357, 8
      %s359 = scalar_lea.vmem %s0, %s358
      %p360 = pneg %p43
      %p361 = pneg %p40
      %s362 = smul.u32 16, %s22
      %p363 = scmp.lt.s32.totalorder %s362, 47
      %s364 = scalar_select %p363, %s362, 47
      %s365 = smul.addr %s364, 8
      %s366 = scalar_lea.vmem %s1, %s365
      %p367 = pneg %p69
      %p368 = pneg %p66
      %p369 = pneg %p90
      %p370 = pneg %p87
      %p371 = pneg %p111
      %p372 = pneg %p108
      %p373 = pneg %p132
      %p374 = pneg %p129
      %p375 = pneg %p153
      %p376 = pneg %p150
      %p377 = pneg %p174
      %p378 = pneg %p171
      %p379 = pneg %p195
      %p380 = pneg %p192
      %p381 = pneg %p216
      %p382 = pneg %p213
      %p383 = pneg %p237
      %p384 = pneg %p234
      %p385 = pneg %p258
      %p386 = pneg %p255
      %p387 = pneg %p284
      %p388 = pneg %p281
      %p389 = scmp.lt.s32.totalorder %s22, 2
      %s390 = scalar_select %p389, %s22, 2
      %s391 = smul.addr %s390, 2
      %s392 = scalar_lea.vmem %s11, %s391
      %s393 = smul.u32 16, %s22
      %p394 = scmp.lt.s32.totalorder %s393, 47
      %s395 = scalar_select %p394, %s393, 47
      %s396 = smul.addr %s395, 8
      %s397 = scalar_lea.vmem %s0, %s396
      %s398 = smul.u32 16, %s22
      %s399 = smul.u32 16, %s22
      %p400 = scmp.lt.s32.totalorder %s399, 47
      %s401 = scalar_select %p400, %s399, 47
      %s402 = smul.addr %s401, 8
      %s403 = scalar_lea.vmem %s1, %s402
      %s404 = smul.u32 16, %s22
      %p405 = scmp.lt.s32.totalorder %s22, 2
      %s406 = scalar_select %p405, %s22, 2
      %s407 = smul.addr %s406, 2
      %s408 = scalar_lea.vmem %s11, %s407
      %v409 = vld [vmem:[%s2] sm:$0xff]
      %v410 = vld [vmem:[%s2 + $0x8] sm:$0xff]
      %v411 = vld [vmem:[%s2 + $0x10] sm:$0xff]
      %v412 = vld [vmem:[%s2 + $0x18] sm:$0xff]
      %v413 = vld [vmem:[%s2 + $0x20] sm:$0xff]
      %v414 = vld [vmem:[%s2 + $0x28] sm:$0xff]
      %v415 = vld [vmem:[%s2 + $0x30] sm:$0xff]
      %v416 = vld [vmem:[%s2 + $0x38] sm:$0xff]
      %v417 = vld [vmem:[%s397] sm:$0xff]
      %v418 = vld [vmem:[%s397 + $0x8] sm:$0xff]
      %v419 = vld [vmem:[%s397 + $0x10] sm:$0xff]
      %v420 = vld [vmem:[%s397 + $0x18] sm:$0xff]
      %v421 = vld [vmem:[%s397 + $0x20] sm:$0xff]
      %v422 = vld [vmem:[%s397 + $0x28] sm:$0xff]
      %v423 = vld [vmem:[%s397 + $0x30] sm:$0xff]
      %v424 = vld [vmem:[%s397 + $0x38] sm:$0xff]
      %v425 = vld [vmem:[%s397 + $0x40] sm:$0xff]
      %v426 = vld [vmem:[%s397 + $0x48] sm:$0xff]
      %v427 = vld [vmem:[%s397 + $0x50] sm:$0xff]
      %v428 = vld [vmem:[%s397 + $0x58] sm:$0xff]
      %v429 = vld [vmem:[%s397 + $0x60] sm:$0xff]
      %v430 = vld [vmem:[%s397 + $0x68] sm:$0xff]
      %v431 = vld [vmem:[%s397 + $0x70] sm:$0xff]
      %v432 = vld [vmem:[%s397 + $0x78] sm:$0xff]
      %v433 = vld [vmem:[%s3] sm:$0xff]
      %v434 = vld [vmem:[%s3 + $0x8] sm:$0xff]
      %v435 = vld [vmem:[%s3 + $0x10] sm:$0xff]
      %v436 = vld [vmem:[%s3 + $0x18] sm:$0xff]
      %v437 = vld [vmem:[%s3 + $0x20] sm:$0xff]
      %v438 = vld [vmem:[%s3 + $0x28] sm:$0xff]
      %v439 = vld [vmem:[%s3 + $0x30] sm:$0xff]
      %v440 = vld [vmem:[%s3 + $0x38] sm:$0xff]
      %v441 = vld [vmem:[%s403] sm:$0xff]
      %v442 = vld [vmem:[%s403 + $0x8] sm:$0xff]
      %v443 = vld [vmem:[%s403 + $0x10] sm:$0xff]
      %v444 = vld [vmem:[%s403 + $0x18] sm:$0xff]
      %v445 = vld [vmem:[%s403 + $0x20] sm:$0xff]
      %v446 = vld [vmem:[%s403 + $0x28] sm:$0xff]
      %v447 = vld [vmem:[%s403 + $0x30] sm:$0xff]
      %v448 = vld [vmem:[%s403 + $0x38] sm:$0xff]
      %v449 = vld [vmem:[%s403 + $0x40] sm:$0xff]
      %v450 = vld [vmem:[%s403 + $0x48] sm:$0xff]
      %v451 = vld [vmem:[%s403 + $0x50] sm:$0xff]
      %v452 = vld [vmem:[%s403 + $0x58] sm:$0xff]
      %v453 = vld [vmem:[%s403 + $0x60] sm:$0xff]
      %v454 = vld [vmem:[%s403 + $0x68] sm:$0xff]
      %v455 = vld [vmem:[%s403 + $0x70] sm:$0xff]
      %v456 = vld [vmem:[%s403 + $0x78] sm:$0xff]
      %vm457 = vcmask 64512
      %v459 = vsel %vm457, %v433, 0
      %v462 = vsel %vm457, %v434, 0
      %v465 = vsel %vm457, %v435, 0
      %v468 = vsel %vm457, %v436, 0
      %v471 = vsel %vm457, %v437, 0
      %v474 = vsel %vm457, %v438, 0
      %v477 = vsel %vm457, %v439, 0
      %v480 = vsel %vm457, %v440, 0
      %v483 = vsel %vm457, %v441, 0
      %v486 = vsel %vm457, %v442, 0
      %v489 = vsel %vm457, %v443, 0
      %v492 = vsel %vm457, %v444, 0
      %v495 = vsel %vm457, %v445, 0
      %v498 = vsel %vm457, %v446, 0
      %v501 = vsel %vm457, %v447, 0
      %v504 = vsel %vm457, %v448, 0
      %v507 = vsel %vm457, %v449, 0
      %v510 = vsel %vm457, %v450, 0
      %v513 = vsel %vm457, %v451, 0
      %v516 = vsel %vm457, %v452, 0
      %v519 = vsel %vm457, %v453, 0
      %v522 = vsel %vm457, %v454, 0
      %v525 = vsel %vm457, %v455, 0
      %v528 = vsel %vm457, %v456, 0
      %530 = vmatpush.xpose.msra.mxu0 %v528
      %531 = vmatpush.xpose.msra.mxu0 %v525
      %532 = vmatpush.xpose.msra.mxu0 %v522
      %533 = vmatpush.xpose.msra.mxu0 %v519
      %534 = vmatpush.xpose.msra.mxu0 %v516
      %535 = vmatpush.xpose.msra.mxu0 %v513
      %536 = vmatpush.xpose.msra.mxu0 %v510
      %537 = vmatpush.xpose.msra.mxu0 %v507
      %538 = vmatpush.xpose.msra.mxu0 %v504
      %539 = vmatpush.xpose.msra.mxu0 %v501
      %540 = vmatpush.xpose.msra.mxu0 %v498
      %541 = vmatpush.xpose.msra.mxu0 %v495
      %542 = vmatpush.xpose.msra.mxu0 %v492
      %543 = vmatpush.xpose.msra.mxu0 %v489
      %544 = vmatpush.xpose.msra.mxu0 %v486
      %545 = vmatpush.xpose.msra.mxu0 %v483
      %546 = vmatmul.f32.gmra.mxu0 %v459
      %v547 = vpop.f32.mrf.mxu0
      %v548 = vadd.f32 0.0, %v547
      %549 = vmatmul.f32.gmra.mxu0 %v462
      %v550 = vpop.f32.mrf.mxu0
      %v551 = vadd.f32 0.0, %v550
      %552 = vmatmul.f32.gmra.mxu0 %v465
      %v553 = vpop.f32.mrf.mxu0
      %v554 = vadd.f32 0.0, %v553
      %555 = vmatmul.f32.gmra.mxu0 %v468
      %v556 = vpop.f32.mrf.mxu0
      %v557 = vadd.f32 0.0, %v556
      %558 = vmatmul.f32.gmra.mxu0 %v471
      %v559 = vpop.f32.mrf.mxu0
      %v560 = vadd.f32 0.0, %v559
      %561 = vmatmul.f32.gmra.mxu0 %v474
      %v562 = vpop.f32.mrf.mxu0
      %v563 = vadd.f32 0.0, %v562
      %564 = vmatmul.f32.gmra.mxu0 %v477
      %v565 = vpop.f32.mrf.mxu0
      %v566 = vadd.f32 0.0, %v565
      %567 = vmatmul.f32.gmra.mxu0 %v480
      %v568 = vpop.f32.mrf.mxu0
      %v569 = vadd.f32 0.0, %v568
      %570 = vdwg.mxu0
      %vm571 = vcmask 130048
      %v573 = vsel %vm571, %v409, 0
      %v576 = vsel %vm571, %v410, 0
      %v579 = vsel %vm571, %v411, 0
      %v582 = vsel %vm571, %v412, 0
      %v585 = vsel %vm571, %v413, 0
      %v588 = vsel %vm571, %v414, 0
      %v591 = vsel %vm571, %v415, 0
      %v594 = vsel %vm571, %v416, 0
      %v597 = vsel %vm571, %v417, 0
      %v600 = vsel %vm571, %v418, 0
      %v603 = vsel %vm571, %v419, 0
      %v606 = vsel %vm571, %v420, 0
      %v609 = vsel %vm571, %v421, 0
      %v612 = vsel %vm571, %v422, 0
      %v615 = vsel %vm571, %v423, 0
      %v618 = vsel %vm571, %v424, 0
      %v621 = vsel %vm571, %v425, 0
      %v624 = vsel %vm571, %v426, 0
      %v627 = vsel %vm571, %v427, 0
      %v630 = vsel %vm571, %v428, 0
      %v633 = vsel %vm571, %v429, 0
      %v636 = vsel %vm571, %v430, 0
      %v639 = vsel %vm571, %v431, 0
      %v642 = vsel %vm571, %v432, 0
      %644 = vmatpush.xpose.msra.mxu0 %v642
      %645 = vmatpush.xpose.msra.mxu0 %v639
      %646 = vmatpush.xpose.msra.mxu0 %v636
      %647 = vmatpush.xpose.msra.mxu0 %v633
      %648 = vmatpush.xpose.msra.mxu0 %v630
      %649 = vmatpush.xpose.msra.mxu0 %v627
      %650 = vmatpush.xpose.msra.mxu0 %v624
      %651 = vmatpush.xpose.msra.mxu0 %v621
      %652 = vmatpush.xpose.msra.mxu0 %v618
      %653 = vmatpush.xpose.msra.mxu0 %v615
      %654 = vmatpush.xpose.msra.mxu0 %v612
      %655 = vmatpush.xpose.msra.mxu0 %v609
      %656 = vmatpush.xpose.msra.mxu0 %v606
      %657 = vmatpush.xpose.msra.mxu0 %v603
      %658 = vmatpush.xpose.msra.mxu0 %v600
      %659 = vmatpush.xpose.msra.mxu0 %v597
      %660 = vmatmul.f32.gmra.mxu0 %v573
      %v661 = vpop.f32.mrf.mxu0
      %v662 = vadd.f32 %v548, %v661
      %663 = vmatmul.f32.gmra.mxu0 %v576
      %v664 = vpop.f32.mrf.mxu0
      %v665 = vadd.f32 %v551, %v664
      %666 = vmatmul.f32.gmra.mxu0 %v579
      %v667 = vpop.f32.mrf.mxu0
      %v668 = vadd.f32 %v554, %v667
      %669 = vmatmul.f32.gmra.mxu0 %v582
      %v670 = vpop.f32.mrf.mxu0
      %v671 = vadd.f32 %v557, %v670
      %672 = vmatmul.f32.gmra.mxu0 %v585
      %v673 = vpop.f32.mrf.mxu0
      %v674 = vadd.f32 %v560, %v673
      %675 = vmatmul.f32.gmra.mxu0 %v588
      %v676 = vpop.f32.mrf.mxu0
      %v677 = vadd.f32 %v563, %v676
      %678 = vmatmul.f32.gmra.mxu0 %v591
      %v679 = vpop.f32.mrf.mxu0
      %v680 = vadd.f32 %v566, %v679
      %681 = vmatmul.f32.gmra.mxu0 %v594
      %v682 = vpop.f32.mrf.mxu0
      %v683 = vadd.f32 %v569, %v682
      %684 = vdwg.mxu0
      %v685 = vld [vmem:[%s4] sm:$0xff]
      %v686 = vld [vmem:[%s4 + $0x8] sm:$0xff]
      %v687 = vld [vmem:[%s4 + $0x10] sm:$0xff]
      %v688 = vld [vmem:[%s4 + $0x18] sm:$0xff]
      %v689 = vld [vmem:[%s4 + $0x20] sm:$0xff]
      %v690 = vld [vmem:[%s4 + $0x28] sm:$0xff]
      %v691 = vld [vmem:[%s4 + $0x30] sm:$0xff]
      %v692 = vld [vmem:[%s4 + $0x38] sm:$0xff]
      %694 = vset.pattern.permute.xlu0 0
      %695 = vperm.xlu0 %694, %v685
      %v696 = vpop.permute.xlu0 %695
      %699 = vset.pattern.permute.xlu0 0
      %700 = vperm.xlu0 %699, %v686
      %v701 = vpop.permute.xlu0 %700
      %704 = vset.pattern.permute.xlu0 0
      %705 = vperm.xlu0 %704, %v687
      %v706 = vpop.permute.xlu0 %705
      %709 = vset.pattern.permute.xlu0 0
      %710 = vperm.xlu0 %709, %v688
      %v711 = vpop.permute.xlu0 %710
      %714 = vset.pattern.permute.xlu0 0
      %715 = vperm.xlu0 %714, %v689
      %v716 = vpop.permute.xlu0 %715
      %719 = vset.pattern.permute.xlu0 0
      %720 = vperm.xlu0 %719, %v690
      %v721 = vpop.permute.xlu0 %720
      %724 = vset.pattern.permute.xlu0 0
      %725 = vperm.xlu0 %724, %v691
      %v726 = vpop.permute.xlu0 %725
      %729 = vset.pattern.permute.xlu0 0
      %730 = vperm.xlu0 %729, %v692
      %v731 = vpop.permute.xlu0 %730
      %v733 = vadd.f32 %v662, %v696
      %v734 = vadd.f32 %v665, %v701
      %v735 = vadd.f32 %v668, %v706
      %v736 = vadd.f32 %v671, %v711
      %v737 = vadd.f32 %v674, %v716
      %v738 = vadd.f32 %v677, %v721
      %v739 = vadd.f32 %v680, %v726
      %v740 = vadd.f32 %v683, %v731
      %v741 = vmax.f32 %v733, 0.0
      %v742 = vmax.f32 %v734, 0.0
      %v743 = vmax.f32 %v735, 0.0
      %v744 = vmax.f32 %v736, 0.0
      %v745 = vmax.f32 %v737, 0.0
      %v746 = vmax.f32 %v738, 0.0
      %v747 = vmax.f32 %v739, 0.0
      %v748 = vmax.f32 %v740, 0.0
      %v749 = vld [vmem:[%s5] sm:$0xff]
      %v750 = vld [vmem:[%s5 + $0x8] sm:$0xff]
      %v751 = vld [vmem:[%s5 + $0x10] sm:$0xff]
      %v752 = vld [vmem:[%s5 + $0x18] sm:$0xff]
      %v753 = vld [vmem:[%s5 + $0x20] sm:$0xff]
      %v754 = vld [vmem:[%s5 + $0x28] sm:$0xff]
      %v755 = vld [vmem:[%s5 + $0x30] sm:$0xff]
      %v756 = vld [vmem:[%s5 + $0x38] sm:$0xff]
      %v757 = vld [vmem:[%s6] sm:$0xff]
      %v758 = vld [vmem:[%s6 + $0x8] sm:$0xff]
      %v759 = vld [vmem:[%s6 + $0x10] sm:$0xff]
      %v760 = vld [vmem:[%s6 + $0x18] sm:$0xff]
      %v761 = vld [vmem:[%s6 + $0x20] sm:$0xff]
      %v762 = vld [vmem:[%s6 + $0x28] sm:$0xff]
      %v763 = vld [vmem:[%s6 + $0x30] sm:$0xff]
      %v764 = vld [vmem:[%s6 + $0x38] sm:$0xff]
      %766 = vset.pattern.permute.xlu0 0
      %767 = vperm.xlu0 %766, %v757
      %v768 = vpop.permute.xlu0 %767
      %771 = vset.pattern.permute.xlu0 0
      %772 = vperm.xlu0 %771, %v758
      %v773 = vpop.permute.xlu0 %772
      %776 = vset.pattern.permute.xlu0 0
      %777 = vperm.xlu0 %776, %v759
      %v778 = vpop.permute.xlu0 %777
      %781 = vset.pattern.permute.xlu0 0
      %782 = vperm.xlu0 %781, %v760
      %v783 = vpop.permute.xlu0 %782
      %786 = vset.pattern.permute.xlu0 0
      %787 = vperm.xlu0 %786, %v761
      %v788 = vpop.permute.xlu0 %787
      %791 = vset.pattern.permute.xlu0 0
      %792 = vperm.xlu0 %791, %v762
      %v793 = vpop.permute.xlu0 %792
      %796 = vset.pattern.permute.xlu0 0
      %797 = vperm.xlu0 %796, %v763
      %v798 = vpop.permute.xlu0 %797
      %801 = vset.pattern.permute.xlu0 0
      %802 = vperm.xlu0 %801, %v764
      %v803 = vpop.permute.xlu0 %802
      %vm805 = vcmask 523264
      %v807 = vsel %vm805, %v749, 0
      %v810 = vsel %vm805, %v750, 0
      %v813 = vsel %vm805, %v751, 0
      %v816 = vsel %vm805, %v752, 0
      %v819 = vsel %vm805, %v753, 0
      %v822 = vsel %vm805, %v754, 0
      %v825 = vsel %vm805, %v755, 0
      %v828 = vsel %vm805, %v756, 0
      %830 = vmatpush.msra.mxu0 0.0
      %831 = vmatpush.msra.mxu0 0.0
      %832 = vmatpush.msra.mxu0 0.0
      %833 = vmatpush.msra.mxu0 0.0
      %834 = vmatpush.msra.mxu0 0.0
      %835 = vmatpush.msra.mxu0 0.0
      %836 = vmatpush.msra.mxu0 0.0
      %837 = vmatpush.msra.mxu0 0.0
      %838 = vmatpush.msra.mxu0 %v748
      %839 = vmatpush.msra.mxu0 %v747
      %840 = vmatpush.msra.mxu0 %v746
      %841 = vmatpush.msra.mxu0 %v745
      %842 = vmatpush.msra.mxu0 %v744
      %843 = vmatpush.msra.mxu0 %v743
      %844 = vmatpush.msra.mxu0 %v742
      %845 = vmatpush.msra.mxu0 %v741
      %846 = vmatmul.f32.gmra.mxu0 %v807
      %v847 = vpop.f32.mrf.mxu0
      %v848 = vadd.f32 %v768, %v847
      %849 = vmatmul.f32.gmra.mxu0 %v810
      %v850 = vpop.f32.mrf.mxu0
      %v851 = vadd.f32 %v773, %v850
      %852 = vmatmul.f32.gmra.mxu0 %v813
      %v853 = vpop.f32.mrf.mxu0
      %v854 = vadd.f32 %v778, %v853
      %855 = vmatmul.f32.gmra.mxu0 %v816
      %v856 = vpop.f32.mrf.mxu0
      %v857 = vadd.f32 %v783, %v856
      %858 = vmatmul.f32.gmra.mxu0 %v819
      %v859 = vpop.f32.mrf.mxu0
      %v860 = vadd.f32 %v788, %v859
      %861 = vmatmul.f32.gmra.mxu0 %v822
      %v862 = vpop.f32.mrf.mxu0
      %v863 = vadd.f32 %v793, %v862
      %864 = vmatmul.f32.gmra.mxu0 %v825
      %v865 = vpop.f32.mrf.mxu0
      %v866 = vadd.f32 %v798, %v865
      %867 = vmatmul.f32.gmra.mxu0 %v828
      %v868 = vpop.f32.mrf.mxu0
      %v869 = vadd.f32 %v803, %v868
      %870 = vdwg.mxu0
      %v871 = vmax.f32 %v848, 0.0
      %v872 = vmax.f32 %v851, 0.0
      %v873 = vmax.f32 %v854, 0.0
      %v874 = vmax.f32 %v857, 0.0
      %v875 = vmax.f32 %v860, 0.0
      %v876 = vmax.f32 %v863, 0.0
      %v877 = vmax.f32 %v866, 0.0
      %v878 = vmax.f32 %v869, 0.0
      %v879 = vld [vmem:[%s7] sm:$0xff]
      %v880 = vld [vmem:[%s7 + $0x8] sm:$0xff]
      %v881 = vld [vmem:[%s7 + $0x10] sm:$0xff]
      %v882 = vld [vmem:[%s7 + $0x18] sm:$0xff]
      %v883 = vld [vmem:[%s7 + $0x20] sm:$0xff]
      %v884 = vld [vmem:[%s7 + $0x28] sm:$0xff]
      %v885 = vld [vmem:[%s7 + $0x30] sm:$0xff]
      %v886 = vld [vmem:[%s7 + $0x38] sm:$0xff]
      %v887 = vld [vmem:[%s8] sm:$0xff]
      %v888 = vld [vmem:[%s8 + $0x8] sm:$0xff]
      %v889 = vld [vmem:[%s8 + $0x10] sm:$0xff]
      %v890 = vld [vmem:[%s8 + $0x18] sm:$0xff]
      %v891 = vld [vmem:[%s8 + $0x20] sm:$0xff]
      %v892 = vld [vmem:[%s8 + $0x28] sm:$0xff]
      %v893 = vld [vmem:[%s8 + $0x30] sm:$0xff]
      %v894 = vld [vmem:[%s8 + $0x38] sm:$0xff]
      %896 = vset.pattern.permute.xlu0 0
      %897 = vperm.xlu0 %896, %v887
      %v898 = vpop.permute.xlu0 %897
      %901 = vset.pattern.permute.xlu0 0
      %902 = vperm.xlu0 %901, %v888
      %v903 = vpop.permute.xlu0 %902
      %906 = vset.pattern.permute.xlu0 0
      %907 = vperm.xlu0 %906, %v889
      %v908 = vpop.permute.xlu0 %907
      %911 = vset.pattern.permute.xlu0 0
      %912 = vperm.xlu0 %911, %v890
      %v913 = vpop.permute.xlu0 %912
      %916 = vset.pattern.permute.xlu0 0
      %917 = vperm.xlu0 %916, %v891
      %v918 = vpop.permute.xlu0 %917
      %921 = vset.pattern.permute.xlu0 0
      %922 = vperm.xlu0 %921, %v892
      %v923 = vpop.permute.xlu0 %922
      %926 = vset.pattern.permute.xlu0 0
      %927 = vperm.xlu0 %926, %v893
      %v928 = vpop.permute.xlu0 %927
      %931 = vset.pattern.permute.xlu0 0
      %932 = vperm.xlu0 %931, %v894
      %v933 = vpop.permute.xlu0 %932
      %v936 = vsel %vm805, %v879, 0
      %v939 = vsel %vm805, %v880, 0
      %v942 = vsel %vm805, %v881, 0
      %v945 = vsel %vm805, %v882, 0
      %v948 = vsel %vm805, %v883, 0
      %v951 = vsel %vm805, %v884, 0
      %v954 = vsel %vm805, %v885, 0
      %v957 = vsel %vm805, %v886, 0
      %959 = vmatpush.msra.mxu0 0.0
      %960 = vmatpush.msra.mxu0 0.0
      %961 = vmatpush.msra.mxu0 0.0
      %962 = vmatpush.msra.mxu0 0.0
      %963 = vmatpush.msra.mxu0 0.0
      %964 = vmatpush.msra.mxu0 0.0
      %965 = vmatpush.msra.mxu0 0.0
      %966 = vmatpush.msra.mxu0 0.0
      %967 = vmatpush.msra.mxu0 %v878
      %968 = vmatpush.msra.mxu0 %v877
      %969 = vmatpush.msra.mxu0 %v876
      %970 = vmatpush.msra.mxu0 %v875
      %971 = vmatpush.msra.mxu0 %v874
      %972 = vmatpush.msra.mxu0 %v873
      %973 = vmatpush.msra.mxu0 %v872
      %974 = vmatpush.msra.mxu0 %v871
      %975 = vmatmul.f32.gmra.mxu0 %v936
      %v976 = vpop.f32.mrf.mxu0
      %v977 = vadd.f32 %v898, %v976
      %978 = vmatmul.f32.gmra.mxu0 %v939
      %v979 = vpop.f32.mrf.mxu0
      %v980 = vadd.f32 %v903, %v979
      %981 = vmatmul.f32.gmra.mxu0 %v942
      %v982 = vpop.f32.mrf.mxu0
      %v983 = vadd.f32 %v908, %v982
      %984 = vmatmul.f32.gmra.mxu0 %v945
      %v985 = vpop.f32.mrf.mxu0
      %v986 = vadd.f32 %v913, %v985
      %987 = vmatmul.f32.gmra.mxu0 %v948
      %v988 = vpop.f32.mrf.mxu0
      %v989 = vadd.f32 %v918, %v988
      %990 = vmatmul.f32.gmra.mxu0 %v951
      %v991 = vpop.f32.mrf.mxu0
      %v992 = vadd.f32 %v923, %v991
      %993 = vmatmul.f32.gmra.mxu0 %v954
      %v994 = vpop.f32.mrf.mxu0
      %v995 = vadd.f32 %v928, %v994
      %996 = vmatmul.f32.gmra.mxu0 %v957
      %v997 = vpop.f32.mrf.mxu0
      %v998 = vadd.f32 %v933, %v997
      %999 = vdwg.mxu0
      %v1000 = vmax.f32 %v977, 0.0
      %v1001 = vmax.f32 %v980, 0.0
      %v1002 = vmax.f32 %v983, 0.0
      %v1003 = vmax.f32 %v986, 0.0
      %v1004 = vmax.f32 %v989, 0.0
      %v1005 = vmax.f32 %v992, 0.0
      %v1006 = vmax.f32 %v995, 0.0
      %v1007 = vmax.f32 %v998, 0.0
      %v1008 = vld [vmem:[%s9] sm:$0x3]
      %v1009 = vld [vmem:[%s10] sm:$0x3]
      %1011 = vset.pattern.permute.xlu0 0
      %1012 = vperm.xlu0 %1011, %v1009
      %v1013 = vpop.permute.xlu0 %1012
      %v1016 = vsel %vm805, %v1008, 0
      %1018 = vmatpush.msra.mxu0 0.0
      %1019 = vmatpush.msra.mxu0 0.0
      %1020 = vmatpush.msra.mxu0 0.0
      %1021 = vmatpush.msra.mxu0 0.0
      %1022 = vmatpush.msra.mxu0 0.0
      %1023 = vmatpush.msra.mxu0 0.0
      %1024 = vmatpush.msra.mxu0 0.0
      %1025 = vmatpush.msra.mxu0 0.0
      %1026 = vmatpush.msra.mxu0 %v1007
      %1027 = vmatpush.msra.mxu0 %v1006
      %1028 = vmatpush.msra.mxu0 %v1005
      %1029 = vmatpush.msra.mxu0 %v1004
      %1030 = vmatpush.msra.mxu0 %v1003
      %1031 = vmatpush.msra.mxu0 %v1002
      %1032 = vmatpush.msra.mxu0 %v1001
      %1033 = vmatpush.msra.mxu0 %v1000
      %1034 = vmatmul.f32.gmra.mxu0 %v1016
      %v1035 = vpop.f32.mrf.mxu0
      %v1036 = vadd.f32 %v1013, %v1035
      %1037 = vdwg.mxu0
      %1038 = vst [vmem:[%s408] sm:$0x3] %v1036
      %p1039 = scmp.lt.s32.totalorder %s22, 2
      %s1040 = scalar_select %p1039, %s22, 2
      %s1041 = smul.addr %s1040, 2
      %s1042 = scalar_lea.vmem %s11, %s1041
      // Predicated region
      $region65: #{critic_forward.1} parent=63 // pred_check
        %p1043 = pneg %p281
      $region66: #{critic_forward.1} parent=63 // pred_check_branch
        %1045 = sbr.rel (%p1043) target = $region68
      $region67: #{critic_forward.1} parent=63 // pred_region
        _
      $region68: #{critic_forward.1} parent=63 // pred_fallthru
        _
    $region64: #{critic_forward.1} parent=5 // pred_fallthru
      _
    %p1046 = scmp.le.s32.totalorder 2, %s17
    // Predicated region
    $region69: #{critic_forward.1} parent=5 // pred_check
      %p1047 = pneg %p1046
    $region70: #{critic_forward.1} parent=5 // pred_check_branch
      %1049 = sbr.rel (%p1047) target = $region72
    $region71: #{critic_forward.1} parent=5 // pred_region
      %s1050 = ssub.s32 %s17, 2
      // Predicated region
      $region73: #{critic_forward.1} parent=71 // pred_check
        %p1051 = pneg %p287
      $region74: #{critic_forward.1} parent=71 // pred_check_branch
        %1053 = sbr.rel (%p1051) target = $region76
      $region75: #{critic_forward.1} parent=71 // pred_region
        %p1054 = scmp.lt.s32.totalorder %s23, 2
        %s1055 = scalar_select %p1054, %s23, 2
        %s1056 = smul.addr %s1055, 2
        %s1057 = scalar_lea.vmem %s11, %s1056
      $region76: #{critic_forward.1} parent=71 // pred_fallthru
        _
    $region72: #{critic_forward.1} parent=5 // pred_fallthru
      _
  $region6: #{critic_forward.1} parent=0 // loop_footer
    %s21 = sadd.s32 1, %s17
  $region7: #{critic_forward.1} parent=0 // loop_footer_branch
    %16 = sbr.rel target = $region3
  $region8: #{critic_forward.1} parent=0 // loop_exit
    _

</llo_original>
